<compile_context>
chip_gen: v6e
topology: v6e:2x2x1
jax: 0.10.0
libtpu: 0.0.40
codegen_flags: <defaults>
</compile_context>

<pallas_src>
import jax
import jax.numpy as jnp
from jax.experimental import pallas as pl
from jax.experimental.pallas import tpu as pltpu


NEG_SLOPE = 0.01   # F.leaky_relu default
PACK = 8           # edge rows folded into the lane dimension


def _round_up(a, b):
    return ((a + b - 1) // b) * b


def _block_diag(w, p):
    """(k, m) -> (p*k, p*m): block-diagonal with p copies of w on the diagonal."""
    k, m = w.shape
    eye = jnp.eye(p, dtype=w.dtype)
    return jnp.einsum("ab,km->akbm", eye, w).reshape(p * k, p * m)


def _gate_v2_kernel(xj_ref, eij_ref, xi_ref,
                    w1j_ref, w1e_ref, w1i_ref, b1_ref, w2_ref, b2_ref,
                    o_ref):
    # All operands are lane-packed: PACK edge rows per sublane row.
    h = jnp.dot(xj_ref[...], w1j_ref[...], preferred_element_type=jnp.float32)
    h = h + jnp.dot(eij_ref[...], w1e_ref[...], preferred_element_type=jnp.float32)
    h = h + jnp.dot(xi_ref[...], w1i_ref[...], preferred_element_type=jnp.float32)
    h = h + b1_ref[...]
    h = jnp.where(h > 0, h, NEG_SLOPE * h)          # leaky_relu
    y = jnp.dot(h, w2_ref[...], preferred_element_type=jnp.float32) + b2_ref[...]
    o_ref[...] = jnp.tanh(y)


def gate_v2(x_i, x_j, e_ij, w1, b1, w2, b2, *, max_edge_tile=8192):
    """Pallas GateV2 forward.

    x_i, x_j, e_ij : (N, in_size) float32
    w1 : (3*in_size, hidden)  (transposed vs torch Linear.weight; rows ordered
                               [x_j | e_ij | x_i] to match the concat order)
    b1 : (hidden,)
    w2 : (hidden, out_size)
    b2 : (out_size,)
    returns (N, out_size) float32
    """
    N, in_size = x_i.shape
    hidden = w1.shape[1]
    out_size = w2.shape[1]
    assert w1.shape[0] == 3 * in_size

    P = PACK
    # ---- choose the packed-row tile (grid is 1-D over packed rows) ---------
    g_raw = -(-N // P)                                   # packed rows of data
    max_tile_g = max(8, _round_up(max_edge_tile // P, 8))
    if g_raw >= 16:
        # at least two grid steps so ("parallel",) uses both TCs on v7x
        tile_g = min(max_tile_g, _round_up(-(-g_raw // 2), 8))
    else:
        tile_g = _round_up(max(g_raw, 1), 8)
    g_pad = _round_up(g_raw, tile_g)
    n_pad = g_pad * P

    # ---- pack edge rows into lanes (free reshape; pad only if needed) ------
    def pack(a):
        if n_pad != N:
            a = jnp.pad(a, ((0, n_pad - N), (0, 0)))
        return a.reshape(g_pad, P * in_size)

    xj_p, e_p, xi_p = pack(x_j), pack(e_ij), pack(x_i)

    # ---- block-diagonal weights so the packed layout is preserved ----------
    w1j = _block_diag(w1[0 * in_size:1 * in_size], P)    # (P*in, P*hidden)
    w1e = _block_diag(w1[1 * in_size:2 * in_size], P)
    w1i = _block_diag(w1[2 * in_size:3 * in_size], P)
    w2p = _block_diag(w2, P)                             # (P*hidden, P*out)
    b1p = jnp.tile(b1, P).reshape(1, P * hidden)
    b2p = jnp.tile(b2, P).reshape(1, P * out_size)

    grid = (g_pad // tile_g,)
    row_spec = pl.BlockSpec((tile_g, P * in_size), lambda i: (i, 0))

    def full(shape):
        return pl.BlockSpec(shape, lambda i: (0, 0))     # resident, no re-DMA

    out_p = pl.pallas_call(
        _gate_v2_kernel,
        out_shape=jax.ShapeDtypeStruct((g_pad, P * out_size), jnp.float32),
        grid_spec=pltpu.PrefetchScalarGridSpec(
            num_scalar_prefetch=0,
            grid=grid,
            in_specs=[
                row_spec, row_spec, row_spec,
                full((P * in_size, P * hidden)),
                full((P * in_size, P * hidden)),
                full((P * in_size, P * hidden)),
                full((1, P * hidden)),
                full((P * hidden, P * out_size)),
                full((1, P * out_size)),
            ],
            out_specs=pl.BlockSpec((tile_g, P * out_size), lambda i: (i, 0)),
        ),
        compiler_params=pltpu.CompilerParams(
            dimension_semantics=("parallel",)),
    )(xj_p, e_p, xi_p, w1j, w1e, w1i, b1p, w2p, b2p)

    return out_p.reshape(n_pad, out_size)[:N]


def reference(x_i, x_j, e_ij, w1, b1, w2, b2):
    x = jnp.concatenate([x_j, e_ij, x_i], axis=-1)
    h = x @ w1 + b1
    h = jnp.where(h > 0, h, NEG_SLOPE * h)
    return jnp.tanh(h @ w2 + b2)


if __name__ == "__main__":
    # Shapes consistent with the module: in_size=4, dim_coff=3 (concat of
    # x_j, e_ij, x_i), hidden=32, out_size=16.
    in_size, dim_coff, hidden, out_size = 4, 3, 32, 16

    key = jax.random.PRNGKey(0)
    k1, k2, k3, k4, k5, k6, k7 = jax.random.split(key, 7)

    F_in = in_size * dim_coff
    w1 = 0.1 * jax.random.normal(k4, (F_in, hidden), dtype=jnp.float32)
    b1 = 0.1 * jax.random.normal(k5, (hidden,), dtype=jnp.float32)
    w2 = 0.1 * jax.random.normal(k6, (hidden, out_size), dtype=jnp.float32)
    b2 = 0.1 * jax.random.normal(k7, (out_size,), dtype=jnp.float32)

    for N in (128, 100):   # aligned case + ragged tail case
        x_i = jax.random.normal(k1, (N, in_size), dtype=jnp.float32)
        x_j = jax.random.normal(k2, (N, in_size), dtype=jnp.float32)
        e_ij = jax.random.normal(k3, (N, in_size), dtype=jnp.float32)

        out = jax.block_until_ready(gate_v2(x_i, x_j, e_ij, w1, b1, w2, b2))
        ref = reference(x_i, x_j, e_ij, w1, b1, w2, b2)
        assert out.shape == (N, out_size)
        assert jnp.allclose(out, ref, atol=1e-5, rtol=1e-5)

    # TODO(synk): agg_q is a user-supplied callable in the original module; it
    # is fixed here to concat([x_j, e_ij], dim=-1) (=> dim_coff = 3).
    print("KERNEL_OK")
</pallas_src>

<mosaic_0001>
module attributes {stable_mosaic.version = 11 : i64} {
  func.func @_gate_v2_kernel(%arg0: i32, %arg1: memref<8x32xf32, #tpu.memory_space<vmem>>, %arg2: memref<8x32xf32, #tpu.memory_space<vmem>>, %arg3: memref<8x32xf32, #tpu.memory_space<vmem>>, %arg4: memref<32x256xf32, #tpu.memory_space<vmem>>, %arg5: memref<32x256xf32, #tpu.memory_space<vmem>>, %arg6: memref<32x256xf32, #tpu.memory_space<vmem>>, %arg7: memref<1x256xf32, #tpu.memory_space<vmem>>, %arg8: memref<256x128xf32, #tpu.memory_space<vmem>>, %arg9: memref<1x128xf32, #tpu.memory_space<vmem>>, %arg10: memref<8x128xf32, #tpu.memory_space<vmem>>) attributes {dimension_semantics = [#tpu.dimension_semantics<parallel>], iteration_bounds = array<i64: 2>, scalar_prefetch = 0 : i64, scratch_operands = 0 : i64, tpu.core_type = #tpu.core_type<tc>, window_params = [{transform_indices = @transform_0, window_bounds = array<i64: 8, 32>}, {transform_indices = @transform_1, window_bounds = array<i64: 8, 32>}, {transform_indices = @transform_2, window_bounds = array<i64: 8, 32>}, {pipeline_mode = #tpu.pipeline_mode<synchronous>, transform_indices = @transform_3, window_bounds = array<i64: 32, 256>}, {pipeline_mode = #tpu.pipeline_mode<synchronous>, transform_indices = @transform_4, window_bounds = array<i64: 32, 256>}, {pipeline_mode = #tpu.pipeline_mode<synchronous>, transform_indices = @transform_5, window_bounds = array<i64: 32, 256>}, {pipeline_mode = #tpu.pipeline_mode<synchronous>, transform_indices = @transform_6, window_bounds = array<i64: 1, 256>}, {pipeline_mode = #tpu.pipeline_mode<synchronous>, transform_indices = @transform_7, window_bounds = array<i64: 256, 128>}, {pipeline_mode = #tpu.pipeline_mode<synchronous>, transform_indices = @transform_8, window_bounds = array<i64: 1, 128>}, {transform_indices = @transform_9, window_bounds = array<i64: 8, 128>}]} {
    %c0 = arith.constant 0 : index
    %c0_0 = arith.constant 0 : index
    %0 = vector.load %arg1[%c0, %c0_0] : memref<8x32xf32, #tpu.memory_space<vmem>>, vector<8x32xf32>
    %c0_1 = arith.constant 0 : index
    %c0_2 = arith.constant 0 : index
    %1 = vector.load %arg4[%c0_1, %c0_2] : memref<32x256xf32, #tpu.memory_space<vmem>>, vector<32x256xf32>
    %cst = arith.constant dense<0.000000e+00> : vector<8x256xf32>
    %2 = tpu.matmul %0, %1, %cst {dimension_numbers = #tpu.dot_dimension_numbers<[1], [0], [0], [1], [0, 0, 1, 1], [], []>} : vector<8x32xf32>, vector<32x256xf32>, vector<8x256xf32> -> vector<8x256xf32>
    %c0_3 = arith.constant 0 : index
    %c0_4 = arith.constant 0 : index
    %3 = vector.load %arg2[%c0_3, %c0_4] : memref<8x32xf32, #tpu.memory_space<vmem>>, vector<8x32xf32>
    %c0_5 = arith.constant 0 : index
    %c0_6 = arith.constant 0 : index
    %4 = vector.load %arg5[%c0_5, %c0_6] : memref<32x256xf32, #tpu.memory_space<vmem>>, vector<32x256xf32>
    %cst_7 = arith.constant dense<0.000000e+00> : vector<8x256xf32>
    %5 = tpu.matmul %3, %4, %cst_7 {dimension_numbers = #tpu.dot_dimension_numbers<[1], [0], [0], [1], [0, 0, 1, 1], [], []>} : vector<8x32xf32>, vector<32x256xf32>, vector<8x256xf32> -> vector<8x256xf32>
    %6 = arith.addf %2, %5 : vector<8x256xf32>
    %c0_8 = arith.constant 0 : index
    %c0_9 = arith.constant 0 : index
    %7 = vector.load %arg3[%c0_8, %c0_9] : memref<8x32xf32, #tpu.memory_space<vmem>>, vector<8x32xf32>
    %c0_10 = arith.constant 0 : index
    %c0_11 = arith.constant 0 : index
    %8 = vector.load %arg6[%c0_10, %c0_11] : memref<32x256xf32, #tpu.memory_space<vmem>>, vector<32x256xf32>
    %cst_12 = arith.constant dense<0.000000e+00> : vector<8x256xf32>
    %9 = tpu.matmul %7, %8, %cst_12 {dimension_numbers = #tpu.dot_dimension_numbers<[1], [0], [0], [1], [0, 0, 1, 1], [], []>} : vector<8x32xf32>, vector<32x256xf32>, vector<8x256xf32> -> vector<8x256xf32>
    %10 = arith.addf %6, %9 : vector<8x256xf32>
    %c0_13 = arith.constant 0 : index
    %c0_14 = arith.constant 0 : index
    %11 = vector.load %arg7[%c0_13, %c0_14] : memref<1x256xf32, #tpu.memory_space<vmem>>, vector<1x256xf32>
    %12 = vector.broadcast %11 : vector<1x256xf32> to vector<8x256xf32>
    %13 = arith.addf %10, %12 : vector<8x256xf32>
    %cst_15 = arith.constant 0.000000e+00 : f32
    %14 = vector.broadcast %cst_15 : f32 to vector<8x256xf32>
    %15 = arith.cmpf ogt, %13, %14 : vector<8x256xf32>
    %cst_16 = arith.constant 0.00999999977 : f32
    %16 = vector.broadcast %cst_16 : f32 to vector<8x256xf32>
    %17 = arith.mulf %16, %13 : vector<8x256xf32>
    %18 = arith.select %15, %13, %17 : vector<8x256xi1>, vector<8x256xf32>
    %c0_17 = arith.constant 0 : index
    %c0_18 = arith.constant 0 : index
    %19 = vector.load %arg8[%c0_17, %c0_18] : memref<256x128xf32, #tpu.memory_space<vmem>>, vector<256x128xf32>
    %cst_19 = arith.constant dense<0.000000e+00> : vector<8x128xf32>
    %20 = tpu.matmul %18, %19, %cst_19 {dimension_numbers = #tpu.dot_dimension_numbers<[1], [0], [0], [1], [0, 0, 1, 1], [], []>} : vector<8x256xf32>, vector<256x128xf32>, vector<8x128xf32> -> vector<8x128xf32>
    %c0_20 = arith.constant 0 : index
    %c0_21 = arith.constant 0 : index
    %21 = vector.load %arg9[%c0_20, %c0_21] : memref<1x128xf32, #tpu.memory_space<vmem>>, vector<1x128xf32>
    %22 = vector.broadcast %21 : vector<1x128xf32> to vector<8x128xf32>
    %23 = arith.addf %20, %22 : vector<8x128xf32>
    %24 = math.tanh %23 : vector<8x128xf32>
    %c0_22 = arith.constant 0 : index
    %c0_23 = arith.constant 0 : index
    %25 = vector.load %arg10[%c0_22, %c0_23] : memref<8x128xf32, #tpu.memory_space<vmem>>, vector<8x128xf32>
    tpu.vector_store %arg10[%c0_22, %c0_23], %24 {strides = array<i32>} : memref<8x128xf32, #tpu.memory_space<vmem>>, vector<8x128xf32>,
    return
  }
  func.func @transform_0(%arg0: i32) -> (i32, i32) {
    %c0_i32 = arith.constant 0 : i32
    %c0_i32_0 = arith.constant 0 : i32
    return %arg0, %c0_i32 : i32, i32
  }
  func.func @transform_1(%arg0: i32) -> (i32, i32) {
    %c0_i32 = arith.constant 0 : i32
    %c0_i32_0 = arith.constant 0 : i32
    return %arg0, %c0_i32 : i32, i32
  }
  func.func @transform_2(%arg0: i32) -> (i32, i32) {
    %c0_i32 = arith.constant 0 : i32
    %c0_i32_0 = arith.constant 0 : i32
    return %arg0, %c0_i32 : i32, i32
  }
  func.func @transform_3(%arg0: i32) -> (i32, i32) {
    %c0_i32 = arith.constant 0 : i32
    %c0_i32_0 = arith.constant 0 : i32
    %c0_i32_1 = arith.constant 0 : i32
    return %c0_i32, %c0_i32_0 : i32, i32
  }
  func.func @transform_4(%arg0: i32) -> (i32, i32) {
    %c0_i32 = arith.constant 0 : i32
    %c0_i32_0 = arith.constant 0 : i32
    %c0_i32_1 = arith.constant 0 : i32
    return %c0_i32, %c0_i32_0 : i32, i32
  }
  func.func @transform_5(%arg0: i32) -> (i32, i32) {
    %c0_i32 = arith.constant 0 : i32
    %c0_i32_0 = arith.constant 0 : i32
    %c0_i32_1 = arith.constant 0 : i32
    return %c0_i32, %c0_i32_0 : i32, i32
  }
  func.func @transform_6(%arg0: i32) -> (i32, i32) {
    %c0_i32 = arith.constant 0 : i32
    %c0_i32_0 = arith.constant 0 : i32
    %c0_i32_1 = arith.constant 0 : i32
    return %c0_i32, %c0_i32_0 : i32, i32
  }
  func.func @transform_7(%arg0: i32) -> (i32, i32) {
    %c0_i32 = arith.constant 0 : i32
    %c0_i32_0 = arith.constant 0 : i32
    %c0_i32_1 = arith.constant 0 : i32
    return %c0_i32, %c0_i32_0 : i32, i32
  }
  func.func @transform_8(%arg0: i32) -> (i32, i32) {
    %c0_i32 = arith.constant 0 : i32
    %c0_i32_0 = arith.constant 0 : i32
    %c0_i32_1 = arith.constant 0 : i32
    return %c0_i32, %c0_i32_0 : i32, i32
  }
  func.func @transform_9(%arg0: i32) -> (i32, i32) {
    %c0_i32 = arith.constant 0 : i32
    %c0_i32_0 = arith.constant 0 : i32
    return %arg0, %c0_i32 : i32, i32
  }
}

</mosaic_0001>

<llo_original>
// kernel: tpu_custom_call.1
$region0: #{tpu_custom_call.1}
  #allocation0 [shape = 'u32[]', space=smem, size = 0x4, offset = 0x4, fixed_abs, tag = 'smem constant byte address 0x4 - core index']
  #allocation1 [shape = 'u32[144,128]{1,0:T(1,128)}', space=vmem, size = 0x12000, scoped, tag = 'internal scratch']
  %s0 = inlined_call_operand.hbm [shape: f32[16,32], index: 0, kind: input, shape index: {}]
  %s1 = inlined_call_operand.hbm [shape: f32[16,32], index: 1, kind: input, shape index: {}]
  %s2 = inlined_call_operand.hbm [shape: f32[16,32], index: 2, kind: input, shape index: {}]
  %s3 = inlined_call_operand.hbm [shape: f32[32,256], index: 3, kind: input, shape index: {}]
  %s4 = inlined_call_operand.hbm [shape: f32[32,256], index: 4, kind: input, shape index: {}]
  %s5 = inlined_call_operand.hbm [shape: f32[32,256], index: 5, kind: input, shape index: {}]
  %s6 = inlined_call_operand.vmem [shape: f32[1,256], index: 6, kind: input, shape index: {}]
  %s7 = inlined_call_operand.hbm [shape: f32[256,128], index: 7, kind: input, shape index: {}]
  %s8 = inlined_call_operand.vmem [shape: f32[1,128], index: 8, kind: input, shape index: {}]
  %s9 = inlined_call_operand.hbm [shape: f32[16,128], index: 9, kind: output, shape index: {}]
  %s10 = sld [smem:[#allocation0]]
  $region97: #{tpu_custom_call.1} parent=0
    _
  %s12 = ssub.s32 1, %s10
  %s13 = scalar_select 0, %s12, %s10
  $region1: #{tpu_custom_call.1} parent=0
    #allocation2 [shape = 'u8[8192]{0}', space=vmem, size = 0x2000, scoped, tag = 'input window, operand 0']
    #allocation3 [shape = 's32[2]{0}', space=sflag, size = 0x8, scoped, tag = 'scoped memory for tpu_custom_call.1']
    #allocation4 [shape = 's32[2]{0}', space=sflag, size = 0x8, scoped, tag = 'scoped memory for tpu_custom_call.1']
    #allocation5 [shape = 'u8[8192]{0}', space=vmem, size = 0x2000, scoped, tag = 'input window, operand 1']
    #allocation6 [shape = 's32[2]{0}', space=sflag, size = 0x8, scoped, tag = 'scoped memory for tpu_custom_call.1']
    #allocation7 [shape = 'u8[8192]{0}', space=vmem, size = 0x2000, scoped, tag = 'input window, operand 2']
    #allocation8 [shape = 'u8[32768]{0}', space=vmem, size = 0x8000, scoped, tag = 'input window, operand 3, single buffered']
    #allocation9 [shape = 's32[1]{0}', space=sflag, size = 0x4, scoped, tag = 'scoped memory for tpu_custom_call.1']
    #allocation10 [shape = 'u8[32768]{0}', space=vmem, size = 0x8000, scoped, tag = 'input window, operand 4, single buffered']
    #allocation11 [shape = 'u8[32768]{0}', space=vmem, size = 0x8000, scoped, tag = 'input window, operand 5, single buffered']
    #allocation12 [shape = 's32[1]{0}', space=sflag, size = 0x4, scoped, tag = 'scoped memory for tpu_custom_call.1']
    #allocation13 [shape = 'u8[131072]{0}', space=vmem, size = 0x20000, scoped, tag = 'input window, operand 7, single buffered']
    #allocation14 [shape = 'u8[8192]{0}', space=vmem, size = 0x2000, scoped, tag = 'output window, operand 0']
    %14 = vsyncpa [#allocation3], 0
    %s15 = scalar_lea.sflag [#allocation3], 1
    %16 = vsyncpa %s15, 0
    %17 = vsyncpa [#allocation6], 0
    %s18 = scalar_lea.sflag [#allocation6], 1
    %19 = vsyncpa %s18, 0
    %20 = vsyncpa [#allocation9], 0
    %21 = vsyncpa [#allocation12], 0
    %22 = vsyncpa [#allocation4], 0
    %s23 = scalar_lea.sflag [#allocation4], 1
    %24 = vsyncpa %s23, 0
    loop: start=0, step=1, limit=4
    $region2: #{tpu_custom_call.1} parent=1 // loop_pre_header
      _
    $region3: #{tpu_custom_call.1} parent=1 // loop_header
      %s26 = sphi 0, %s30
      %p27 = scmp.ge.s32.totalorder %s26, 4
      %s36 = sphi 0, %s38
      %s39 = sphi 0, %s36
      %s40 = sphi 0, %s39
      %s56 = sphi 0, %s40
      %s62 = sphi 0, %s64
      %s65 = sphi 0, %s62
      %s66 = sphi 0, %s65
      %s82 = sphi 0, %s66
      %s88 = sphi 0, %s90
      %s91 = sphi 0, %s88
      %s92 = sphi 0, %s91
      %s108 = sphi 0, %s92
      %s112 = sphi 0, %s112
      %s114 = sphi 0, %s112
      %s115 = sphi 0, %s114
      %s129 = sphi 0, %s115
      %s133 = sphi 0, %s133
      %s135 = sphi 0, %s133
      %s136 = sphi 0, %s135
      %s150 = sphi 0, %s136
      %s154 = sphi 0, %s154
      %s156 = sphi 0, %s154
      %s157 = sphi 0, %s156
      %s171 = sphi 0, %s157
      %s175 = sphi 0, %s175
      %s177 = sphi 0, %s175
      %s178 = sphi 0, %s177
      %s192 = sphi 0, %s178
      %s196 = sphi 0, %s196
      %s198 = sphi 0, %s196
      %s199 = sphi 0, %s198
      %s213 = sphi 0, %s199
      %s217 = sphi 0, %s217
      %s219 = sphi 0, %s217
      %s220 = sphi 0, %s219
      %s234 = sphi 0, %s220
      %s240 = sphi 0, %s242
      %s243 = sphi 0, %s240
      %s244 = sphi 0, %s243
      %s260 = sphi 0, %s244
    $region4: #{tpu_custom_call.1} parent=1 // loop_header_branch
      %29 = sbr.rel (%p27) target = $region8
    $region5: #{tpu_custom_call.1} parent=1 // loop_body
      %s31 = ssub.s32 %s26, 1
      %s32 = ssub.s32 %s26, 2
      %s33 = sadd.s32 %s26, 1
      %s34 = ssub.s32 %s26, %s33
      %p35 = scmp.eq.s32.totalorder %s34, 0
      %s37 = sadd.s32 %s36, 1
      %s38 = scalar_select %p35, %s36, %s37
      %p41 = pneg %p35
      %p42 = scmp.eq.s32.totalorder %s26, 1
      %p43 = por %p41, %p42
      %p44 = scmp.ne.s32.totalorder %s36, %s39
      %p45 = scmp.eq.s32.totalorder %s26, 0
      %p46 = por %p44, %p45
      %p47 = scmp.ne.s32.totalorder %s36, %s39
      %p48 = scmp.eq.s32.totalorder %s31, 1
      %p49 = por %p47, %p48
      %p50 = scmp.ne.s32.totalorder %s39, %s40
      %p51 = scmp.eq.s32.totalorder %s31, 0
      %p52 = por %p50, %p51
      %p53 = scmp.ne.s32.totalorder %s39, %s40
      %p54 = scmp.eq.s32.totalorder %s32, 1
      %p55 = por %p53, %p54
      %p57 = scmp.ne.s32.totalorder %s40, %s56
      %p58 = scmp.eq.s32.totalorder %s32, 0
      %p59 = por %p57, %p58
      %s60 = ssub.s32 %s26, %s33
      %p61 = scmp.eq.s32.totalorder %s60, 0
      %s63 = sadd.s32 %s62, 1
      %s64 = scalar_select %p61, %s62, %s63
      %p67 = pneg %p61
      %p68 = scmp.eq.s32.totalorder %s26, 1
      %p69 = por %p67, %p68
      %p70 = scmp.ne.s32.totalorder %s62, %s65
      %p71 = scmp.eq.s32.totalorder %s26, 0
      %p72 = por %p70, %p71
      %p73 = scmp.ne.s32.totalorder %s62, %s65
      %p74 = scmp.eq.s32.totalorder %s31, 1
      %p75 = por %p73, %p74
      %p76 = scmp.ne.s32.totalorder %s65, %s66
      %p77 = scmp.eq.s32.totalorder %s31, 0
      %p78 = por %p76, %p77
      %p79 = scmp.ne.s32.totalorder %s65, %s66
      %p80 = scmp.eq.s32.totalorder %s32, 1
      %p81 = por %p79, %p80
      %p83 = scmp.ne.s32.totalorder %s66, %s82
      %p84 = scmp.eq.s32.totalorder %s32, 0
      %p85 = por %p83, %p84
      %s86 = ssub.s32 %s26, %s33
      %p87 = scmp.eq.s32.totalorder %s86, 0
      %s89 = sadd.s32 %s88, 1
      %s90 = scalar_select %p87, %s88, %s89
      %p93 = pneg %p87
      %p94 = scmp.eq.s32.totalorder %s26, 1
      %p95 = por %p93, %p94
      %p96 = scmp.ne.s32.totalorder %s88, %s91
      %p97 = scmp.eq.s32.totalorder %s26, 0
      %p98 = por %p96, %p97
      %p99 = scmp.ne.s32.totalorder %s88, %s91
      %p100 = scmp.eq.s32.totalorder %s31, 1
      %p101 = por %p99, %p100
      %p102 = scmp.ne.s32.totalorder %s91, %s92
      %p103 = scmp.eq.s32.totalorder %s31, 0
      %p104 = por %p102, %p103
      %p105 = scmp.ne.s32.totalorder %s91, %s92
      %p106 = scmp.eq.s32.totalorder %s32, 1
      %p107 = por %p105, %p106
      %p109 = scmp.ne.s32.totalorder %s92, %s108
      %p110 = scmp.eq.s32.totalorder %s32, 0
      %p111 = por %p109, %p110
      %s113 = sadd.s32 %s112, 1
      %p116 = scmp.eq.s32.totalorder %s26, 1
      %p117 = scmp.ne.s32.totalorder %s112, %s114
      %p118 = scmp.eq.s32.totalorder %s26, 0
      %p119 = por %p117, %p118
      %p120 = scmp.ne.s32.totalorder %s112, %s114
      %p121 = scmp.eq.s32.totalorder %s31, 1
      %p122 = por %p120, %p121
      %p123 = scmp.ne.s32.totalorder %s114, %s115
      %p124 = scmp.eq.s32.totalorder %s31, 0
      %p125 = por %p123, %p124
      %p126 = scmp.ne.s32.totalorder %s114, %s115
      %p127 = scmp.eq.s32.totalorder %s32, 1
      %p128 = por %p126, %p127
      %p130 = scmp.ne.s32.totalorder %s115, %s129
      %p131 = scmp.eq.s32.totalorder %s32, 0
      %p132 = por %p130, %p131
      %s134 = sadd.s32 %s133, 1
      %p137 = scmp.eq.s32.totalorder %s26, 1
      %p138 = scmp.ne.s32.totalorder %s133, %s135
      %p139 = scmp.eq.s32.totalorder %s26, 0
      %p140 = por %p138, %p139
      %p141 = scmp.ne.s32.totalorder %s133, %s135
      %p142 = scmp.eq.s32.totalorder %s31, 1
      %p143 = por %p141, %p142
      %p144 = scmp.ne.s32.totalorder %s135, %s136
      %p145 = scmp.eq.s32.totalorder %s31, 0
      %p146 = por %p144, %p145
      %p147 = scmp.ne.s32.totalorder %s135, %s136
      %p148 = scmp.eq.s32.totalorder %s32, 1
      %p149 = por %p147, %p148
      %p151 = scmp.ne.s32.totalorder %s136, %s150
      %p152 = scmp.eq.s32.totalorder %s32, 0
      %p153 = por %p151, %p152
      %s155 = sadd.s32 %s154, 1
      %p158 = scmp.eq.s32.totalorder %s26, 1
      %p159 = scmp.ne.s32.totalorder %s154, %s156
      %p160 = scmp.eq.s32.totalorder %s26, 0
      %p161 = por %p159, %p160
      %p162 = scmp.ne.s32.totalorder %s154, %s156
      %p163 = scmp.eq.s32.totalorder %s31, 1
      %p164 = por %p162, %p163
      %p165 = scmp.ne.s32.totalorder %s156, %s157
      %p166 = scmp.eq.s32.totalorder %s31, 0
      %p167 = por %p165, %p166
      %p168 = scmp.ne.s32.totalorder %s156, %s157
      %p169 = scmp.eq.s32.totalorder %s32, 1
      %p170 = por %p168, %p169
      %p172 = scmp.ne.s32.totalorder %s157, %s171
      %p173 = scmp.eq.s32.totalorder %s32, 0
      %p174 = por %p172, %p173
      %s176 = sadd.s32 %s175, 1
      %p179 = scmp.eq.s32.totalorder %s26, 1
      %p180 = scmp.ne.s32.totalorder %s175, %s177
      %p181 = scmp.eq.s32.totalorder %s26, 0
      %p182 = por %p180, %p181
      %p183 = scmp.ne.s32.totalorder %s175, %s177
      %p184 = scmp.eq.s32.totalorder %s31, 1
      %p185 = por %p183, %p184
      %p186 = scmp.ne.s32.totalorder %s177, %s178
      %p187 = scmp.eq.s32.totalorder %s31, 0
      %p188 = por %p186, %p187
      %p189 = scmp.ne.s32.totalorder %s177, %s178
      %p190 = scmp.eq.s32.totalorder %s32, 1
      %p191 = por %p189, %p190
      %p193 = scmp.ne.s32.totalorder %s178, %s192
      %p194 = scmp.eq.s32.totalorder %s32, 0
      %p195 = por %p193, %p194
      %s197 = sadd.s32 %s196, 1
      %p200 = scmp.eq.s32.totalorder %s26, 1
      %p201 = scmp.ne.s32.totalorder %s196, %s198
      %p202 = scmp.eq.s32.totalorder %s26, 0
      %p203 = por %p201, %p202
      %p204 = scmp.ne.s32.totalorder %s196, %s198
      %p205 = scmp.eq.s32.totalorder %s31, 1
      %p206 = por %p204, %p205
      %p207 = scmp.ne.s32.totalorder %s198, %s199
      %p208 = scmp.eq.s32.totalorder %s31, 0
      %p209 = por %p207, %p208
      %p210 = scmp.ne.s32.totalorder %s198, %s199
      %p211 = scmp.eq.s32.totalorder %s32, 1
      %p212 = por %p210, %p211
      %p214 = scmp.ne.s32.totalorder %s199, %s213
      %p215 = scmp.eq.s32.totalorder %s32, 0
      %p216 = por %p214, %p215
      %s218 = sadd.s32 %s217, 1
      %p221 = scmp.eq.s32.totalorder %s26, 1
      %p222 = scmp.ne.s32.totalorder %s217, %s219
      %p223 = scmp.eq.s32.totalorder %s26, 0
      %p224 = por %p222, %p223
      %p225 = scmp.ne.s32.totalorder %s217, %s219
      %p226 = scmp.eq.s32.totalorder %s31, 1
      %p227 = por %p225, %p226
      %p228 = scmp.ne.s32.totalorder %s219, %s220
      %p229 = scmp.eq.s32.totalorder %s31, 0
      %p230 = por %p228, %p229
      %p231 = scmp.ne.s32.totalorder %s219, %s220
      %p232 = scmp.eq.s32.totalorder %s32, 1
      %p233 = por %p231, %p232
      %p235 = scmp.ne.s32.totalorder %s220, %s234
      %p236 = scmp.eq.s32.totalorder %s32, 0
      %p237 = por %p235, %p236
      %s238 = ssub.s32 %s26, %s33
      %p239 = scmp.eq.s32.totalorder %s238, 0
      %s241 = sadd.s32 %s240, 1
      %s242 = scalar_select %p239, %s240, %s241
      %p245 = pneg %p239
      %p246 = scmp.eq.s32.totalorder %s26, 1
      %p247 = por %p245, %p246
      %p248 = scmp.ne.s32.totalorder %s240, %s243
      %p249 = scmp.eq.s32.totalorder %s26, 0
      %p250 = por %p248, %p249
      %p251 = scmp.ne.s32.totalorder %s240, %s243
      %p252 = scmp.eq.s32.totalorder %s31, 1
      %p253 = por %p251, %p252
      %p254 = scmp.ne.s32.totalorder %s243, %s244
      %p255 = scmp.eq.s32.totalorder %s31, 0
      %p256 = por %p254, %p255
      %p257 = scmp.ne.s32.totalorder %s243, %s244
      %p258 = scmp.eq.s32.totalorder %s32, 1
      %p259 = por %p257, %p258
      %p261 = scmp.ne.s32.totalorder %s244, %s260
      %p262 = scmp.eq.s32.totalorder %s32, 0
      %p263 = por %p261, %p262
      %p264 = scmp.le.s32.totalorder 1, %s26
      %p265 = scmp.lt.s32.totalorder %s26, 3
      %p266 = pnand %p264, %p265
      %p267 = pneg %p266
      // Predicated region
      $region9: #{tpu_custom_call.1} parent=5 // pred_check
        _
      $region10: #{tpu_custom_call.1} parent=5 // pred_check_branch
        %269 = sbr.rel (%p266) target = $region12
      $region11: #{tpu_custom_call.1} parent=5 // pred_region
        %s270 = ssub.s32 %s26, 1
        // Predicated region
        $region13: #{tpu_custom_call.1} parent=11 // pred_check
          %p271 = pneg %p125
        $region14: #{tpu_custom_call.1} parent=11 // pred_check_branch
          %273 = sbr.rel (%p271) target = $region16
        $region15: #{tpu_custom_call.1} parent=11 // pred_region
          %s275 = ssub.s32 1024, 1024
          %276 = vsyncadd [#allocation9], %s275
          %s277 = sshll.u32 [#allocation8], 4
          %s278 = int_to_ptr.vmem [resolvable:$true] %s277
          %283 = dma.hbm_to_vmem [thread:$0]  %s3, 1024, %s278, [#allocation9], 256, 256, 16
        $region16: #{tpu_custom_call.1} parent=11 // pred_fallthru
          _
        // Predicated region
        $region17: #{tpu_custom_call.1} parent=11 // pred_check
          %p284 = pneg %p146
        $region18: #{tpu_custom_call.1} parent=11 // pred_check_branch
          %286 = sbr.rel (%p284) target = $region20
        $region19: #{tpu_custom_call.1} parent=11 // pred_region
          %s288 = ssub.s32 1024, 1024
          %289 = vsyncadd [#allocation9], %s288
          %s290 = sshll.u32 [#allocation10], 4
          %s291 = int_to_ptr.vmem [resolvable:$true] %s290
          %296 = dma.hbm_to_vmem [thread:$0]  %s4, 1024, %s291, [#allocation9], 256, 256, 16
        $region20: #{tpu_custom_call.1} parent=11 // pred_fallthru
          _
        // Predicated region
        $region21: #{tpu_custom_call.1} parent=11 // pred_check
          %p297 = pneg %p167
        $region22: #{tpu_custom_call.1} parent=11 // pred_check_branch
          %299 = sbr.rel (%p297) target = $region24
        $region23: #{tpu_custom_call.1} parent=11 // pred_region
          %s301 = ssub.s32 1024, 1024
          %302 = vsyncadd [#allocation12], %s301
          %s303 = sshll.u32 [#allocation11], 4
          %s304 = int_to_ptr.vmem [resolvable:$true] %s303
          %309 = dma.hbm_to_vmem [thread:$0]  %s5, 1024, %s304, [#allocation12], 256, 256, 16
        $region24: #{tpu_custom_call.1} parent=11 // pred_fallthru
          _
        // Predicated region
        $region25: #{tpu_custom_call.1} parent=11 // pred_check
          %p310 = pneg %p188
        $region26: #{tpu_custom_call.1} parent=11 // pred_check_branch
          %312 = sbr.rel (%p310) target = $region28
        $region27: #{tpu_custom_call.1} parent=11 // pred_region
          _
        $region28: #{tpu_custom_call.1} parent=11 // pred_fallthru
          _
        // Predicated region
        $region29: #{tpu_custom_call.1} parent=11 // pred_check
          %p313 = pneg %p209
        $region30: #{tpu_custom_call.1} parent=11 // pred_check_branch
          %315 = sbr.rel (%p313) target = $region32
        $region31: #{tpu_custom_call.1} parent=11 // pred_region
          %s317 = ssub.s32 4096, 4096
          %318 = vsyncadd [#allocation12], %s317
          %s319 = sshll.u32 [#allocation13], 4
          %s320 = int_to_ptr.vmem [resolvable:$true] %s319
          %325 = dma.hbm_to_vmem [thread:$0]  %s7, 4096, %s320, [#allocation12], 128, 128, 8
        $region32: #{tpu_custom_call.1} parent=11 // pred_fallthru
          _
        // Predicated region
        $region33: #{tpu_custom_call.1} parent=11 // pred_check
          %p326 = pneg %p230
        $region34: #{tpu_custom_call.1} parent=11 // pred_check_branch
          %328 = sbr.rel (%p326) target = $region36
        $region35: #{tpu_custom_call.1} parent=11 // pred_region
          _
        $region36: #{tpu_custom_call.1} parent=11 // pred_fallthru
          _
      $region12: #{tpu_custom_call.1} parent=5 // pred_fallthru
        _
      %p329 = scmp.lt.s32.totalorder %s26, 2
      // Predicated region
      $region37: #{tpu_custom_call.1} parent=5 // pred_check
        %p330 = pneg %p329
      $region38: #{tpu_custom_call.1} parent=5 // pred_check_branch
        %332 = sbr.rel (%p330) target = $region40
      $region39: #{tpu_custom_call.1} parent=5 // pred_region
        // Predicated region
        $region41: #{tpu_custom_call.1} parent=39 // pred_check
          %p333 = pneg %p46
        $region42: #{tpu_custom_call.1} parent=39 // pred_check_branch
          %335 = sbr.rel (%p333) target = $region44
        $region43: #{tpu_custom_call.1} parent=39 // pred_region
          %s336 = sand.u32 %s36, 1
          %s337 = scalar_lea.sflag [#allocation3], %s336
          %s338 = sand.u32 %s36, 1
          %s339 = smul.addr %s338, 8
          %s340 = scalar_lea.vmem [#allocation2], %s339
          %s342 = ssub.s32 128, 128
          %343 = vsyncadd %s337, %s342
          %s344 = smul.addr %s26, 128
          %s345 = scalar_lea.hbm %s0, %s344
          %s347 = sshll.u32 %s340, 4
          %s348 = int_to_ptr.vmem [resolvable:$true] %s347
          %350 = dma.hbm_to_vmem [thread:$0]  %s345, 128, %s348, %s337
        $region44: #{tpu_custom_call.1} parent=39 // pred_fallthru
          _
        // Predicated region
        $region45: #{tpu_custom_call.1} parent=39 // pred_check
          %p351 = pneg %p72
        $region46: #{tpu_custom_call.1} parent=39 // pred_check_branch
          %353 = sbr.rel (%p351) target = $region48
        $region47: #{tpu_custom_call.1} parent=39 // pred_region
          %s354 = sand.u32 %s26, 1
          %s355 = scalar_lea.sflag [#allocation6], %s354
          %s356 = sand.u32 %s62, 1
          %s357 = smul.addr %s356, 8
          %s358 = scalar_lea.vmem [#allocation5], %s357
          %s360 = ssub.s32 128, 128
          %361 = vsyncadd %s355, %s360
          %s362 = smul.addr %s26, 128
          %s363 = scalar_lea.hbm %s1, %s362
          %s365 = sshll.u32 %s358, 4
          %s366 = int_to_ptr.vmem [resolvable:$true] %s365
          %368 = dma.hbm_to_vmem [thread:$0]  %s363, 128, %s366, %s355
        $region48: #{tpu_custom_call.1} parent=39 // pred_fallthru
          _
        // Predicated region
        $region49: #{tpu_custom_call.1} parent=39 // pred_check
          %p369 = pneg %p98
        $region50: #{tpu_custom_call.1} parent=39 // pred_check_branch
          %371 = sbr.rel (%p369) target = $region52
        $region51: #{tpu_custom_call.1} parent=39 // pred_region
          %s372 = sand.u32 %s26, 1
          %s373 = scalar_lea.sflag [#allocation6], %s372
          %s374 = sand.u32 %s88, 1
          %s375 = smul.addr %s374, 8
          %s376 = scalar_lea.vmem [#allocation7], %s375
          %s378 = ssub.s32 128, 128
          %379 = vsyncadd %s373, %s378
          %s380 = smul.addr %s26, 128
          %s381 = scalar_lea.hbm %s2, %s380
          %s383 = sshll.u32 %s376, 4
          %s384 = int_to_ptr.vmem [resolvable:$true] %s383
          %386 = dma.hbm_to_vmem [thread:$0]  %s381, 128, %s384, %s373
        $region52: #{tpu_custom_call.1} parent=39 // pred_fallthru
          _
      $region40: #{tpu_custom_call.1} parent=5 // pred_fallthru
        _
      %p387 = scmp.le.s32.totalorder 1, %s26
      %p388 = scmp.lt.s32.totalorder %s26, 3
      %p389 = pnand %p387, %p388
      %p390 = pneg %p389
      // Predicated region
      $region53: #{tpu_custom_call.1} parent=5 // pred_check
        _
      $region54: #{tpu_custom_call.1} parent=5 // pred_check_branch
        %392 = sbr.rel (%p389) target = $region56
      $region55: #{tpu_custom_call.1} parent=5 // pred_region
        %s393 = ssub.s32 %s26, 1
        %s394 = sand.u32 %s39, 1
        %s395 = scalar_lea.sflag [#allocation3], %s394
        %s396 = sand.u32 %s39, 1
        %s397 = smul.addr %s396, 8
        %s398 = scalar_lea.vmem [#allocation2], %s397
        // Predicated region
        $region57: #{tpu_custom_call.1} parent=55 // pred_check
          %p399 = pneg %p52
        $region58: #{tpu_custom_call.1} parent=55 // pred_check_branch
          %401 = sbr.rel (%p399) target = $region60
        $region59: #{tpu_custom_call.1} parent=55 // pred_region
          %402 = dma.done %s395, 128
        $region60: #{tpu_custom_call.1} parent=55 // pred_fallthru
          _
        %s403 = sand.u32 %s31, 1
        %s404 = scalar_lea.sflag [#allocation6], %s403
        %s405 = sand.u32 %s65, 1
        %s406 = smul.addr %s405, 8
        %s407 = scalar_lea.vmem [#allocation5], %s406
        // Predicated region
        $region61: #{tpu_custom_call.1} parent=55 // pred_check
          %p408 = pneg %p78
        $region62: #{tpu_custom_call.1} parent=55 // pred_check_branch
          %410 = sbr.rel (%p408) target = $region64
        $region63: #{tpu_custom_call.1} parent=55 // pred_region
          %411 = dma.done %s404, 128
        $region64: #{tpu_custom_call.1} parent=55 // pred_fallthru
          _
        %s412 = sand.u32 %s31, 1
        %s413 = scalar_lea.sflag [#allocation6], %s412
        %s414 = sand.u32 %s91, 1
        %s415 = smul.addr %s414, 8
        %s416 = scalar_lea.vmem [#allocation7], %s415
        // Predicated region
        $region65: #{tpu_custom_call.1} parent=55 // pred_check
          %p417 = pneg %p104
        $region66: #{tpu_custom_call.1} parent=55 // pred_check_branch
          %419 = sbr.rel (%p417) target = $region68
        $region67: #{tpu_custom_call.1} parent=55 // pred_region
          %420 = dma.done %s413, 128
        $region68: #{tpu_custom_call.1} parent=55 // pred_fallthru
          _
        // Predicated region
        $region69: #{tpu_custom_call.1} parent=55 // pred_check
          %p421 = pneg %p125
        $region70: #{tpu_custom_call.1} parent=55 // pred_check_branch
          %423 = sbr.rel (%p421) target = $region72
        $region71: #{tpu_custom_call.1} parent=55 // pred_region
          %424 = dma.done [#allocation9], 1024
        $region72: #{tpu_custom_call.1} parent=55 // pred_fallthru
          _
        // Predicated region
        $region73: #{tpu_custom_call.1} parent=55 // pred_check
          %p425 = pneg %p146
        $region74: #{tpu_custom_call.1} parent=55 // pred_check_branch
          %427 = sbr.rel (%p425) target = $region76
        $region75: #{tpu_custom_call.1} parent=55 // pred_region
          %428 = dma.done [#allocation9], 1024
        $region76: #{tpu_custom_call.1} parent=55 // pred_fallthru
          _
        // Predicated region
        $region77: #{tpu_custom_call.1} parent=55 // pred_check
          %p429 = pneg %p167
        $region78: #{tpu_custom_call.1} parent=55 // pred_check_branch
          %431 = sbr.rel (%p429) target = $region80
        $region79: #{tpu_custom_call.1} parent=55 // pred_region
          %432 = dma.done [#allocation12], 1024
        $region80: #{tpu_custom_call.1} parent=55 // pred_fallthru
          _
        // Predicated region
        $region81: #{tpu_custom_call.1} parent=55 // pred_check
          %p433 = pneg %p209
        $region82: #{tpu_custom_call.1} parent=55 // pred_check_branch
          %435 = sbr.rel (%p433) target = $region84
        $region83: #{tpu_custom_call.1} parent=55 // pred_region
          %436 = dma.done [#allocation12], 4096
        $region84: #{tpu_custom_call.1} parent=55 // pred_fallthru
          _
        %s437 = sand.u32 %s39, 1
        %s438 = scalar_lea.sflag [#allocation3], %s437
        %s439 = sand.u32 %s39, 1
        %s440 = smul.addr %s439, 8
        %s441 = scalar_lea.vmem [#allocation2], %s440
        %p442 = pneg %p52
        %p443 = pneg %p49
        %s444 = sand.u32 %s31, 1
        %s445 = scalar_lea.sflag [#allocation6], %s444
        %s446 = sand.u32 %s65, 1
        %s447 = smul.addr %s446, 8
        %s448 = scalar_lea.vmem [#allocation5], %s447
        %p449 = pneg %p78
        %p450 = pneg %p75
        %s451 = sand.u32 %s31, 1
        %s452 = scalar_lea.sflag [#allocation6], %s451
        %s453 = sand.u32 %s91, 1
        %s454 = smul.addr %s453, 8
        %s455 = scalar_lea.vmem [#allocation7], %s454
        %p456 = pneg %p104
        %p457 = pneg %p101
        %p458 = pneg %p125
        %p459 = pneg %p122
        %p460 = pneg %p146
        %p461 = pneg %p143
        %p462 = pneg %p167
        %p463 = pneg %p164
        %p464 = pneg %p188
        %p465 = pneg %p185
        %p466 = pneg %p209
        %p467 = pneg %p206
        %p468 = pneg %p230
        %p469 = pneg %p227
        %p470 = pneg %p256
        %p471 = pneg %p253
        %s472 = sand.u32 %s243, 1
        %s473 = scalar_lea.sflag [#allocation4], %s472
        %s474 = sand.u32 %s243, 1
        %s475 = smul.addr %s474, 8
        %s476 = scalar_lea.vmem [#allocation14], %s475
        %v477 = vld [vmem:[%s398] sm:$0xff]
        %v478 = vld [vmem:[#allocation8] sm:$0xff]
        %v479 = vld [vmem:[#allocation8 + $0x8] sm:$0xff]
        %v480 = vld [vmem:[#allocation8 + $0x10] sm:$0xff]
        %v481 = vld [vmem:[#allocation8 + $0x18] sm:$0xff]
        %v482 = vld [vmem:[#allocation8 + $0x20] sm:$0xff]
        %v483 = vld [vmem:[#allocation8 + $0x28] sm:$0xff]
        %v484 = vld [vmem:[#allocation8 + $0x30] sm:$0xff]
        %v485 = vld [vmem:[#allocation8 + $0x38] sm:$0xff]
        %v486 = vld [vmem:[%s407] sm:$0xff]
        %v487 = vld [vmem:[#allocation10] sm:$0xff]
        %v488 = vld [vmem:[#allocation10 + $0x8] sm:$0xff]
        %v489 = vld [vmem:[#allocation10 + $0x10] sm:$0xff]
        %v490 = vld [vmem:[#allocation10 + $0x18] sm:$0xff]
        %v491 = vld [vmem:[#allocation10 + $0x20] sm:$0xff]
        %v492 = vld [vmem:[#allocation10 + $0x28] sm:$0xff]
        %v493 = vld [vmem:[#allocation10 + $0x30] sm:$0xff]
        %v494 = vld [vmem:[#allocation10 + $0x38] sm:$0xff]
        %vm495 = vcmask 261120
        %v497 = vsel %vm495, %v486, 0
        %499 = vmatprep.subr.mxu0 0.0
        %500 = vmatpush1.msra.mxu0 0.0
        %501 = vmatprep.subr.mxu0 0.0
        %502 = vmatpush1.msra.mxu0 0.0
        %503 = vmatprep.subr.mxu0 0.0
        %504 = vmatpush1.msra.mxu0 0.0
        %505 = vmatprep.subr.mxu0 0.0
        %506 = vmatpush1.msra.mxu0 0.0
        %507 = vmatprep.subr.mxu0 0.0
        %508 = vmatpush1.msra.mxu0 0.0
        %509 = vmatprep.subr.mxu0 0.0
        %510 = vmatpush1.msra.mxu0 0.0
        %511 = vmatprep.subr.mxu0 0.0
        %512 = vmatpush1.msra.mxu0 0.0
        %513 = vmatprep.subr.mxu0 0.0
        %514 = vmatpush1.msra.mxu0 0.0
        %515 = vmatprep.subr.mxu0 0.0
        %516 = vmatpush1.msra.mxu0 0.0
        %517 = vmatprep.subr.mxu0 0.0
        %518 = vmatpush1.msra.mxu0 0.0
        %519 = vmatprep.subr.mxu0 0.0
        %520 = vmatpush1.msra.mxu0 0.0
        %521 = vmatprep.subr.mxu0 0.0
        %522 = vmatpush1.msra.mxu0 0.0
        %523 = vmatprep.subr.mxu0 %v494
        %524 = vmatpush1.msra.mxu0 %v493
        %525 = vmatprep.subr.mxu0 %v492
        %526 = vmatpush1.msra.mxu0 %v491
        %527 = vmatprep.subr.mxu0 %v490
        %528 = vmatpush1.msra.mxu0 %v489
        %529 = vmatprep.subr.mxu0 %v488
        %530 = vmatpush1.msra.mxu0 %v487
        %531 = vmatprep.subr.mxu0 0.0
        %532 = vmatpush2.msra.mxu0 0.0
        %533 = vmatprep.subr.mxu0 0.0
        %534 = vmatpush2.msra.mxu0 0.0
        %535 = vmatprep.subr.mxu0 0.0
        %536 = vmatpush2.msra.mxu0 0.0
        %537 = vmatprep.subr.mxu0 0.0
        %538 = vmatpush2.msra.mxu0 0.0
        %539 = vmatprep.subr.mxu0 0.0
        %540 = vmatpush2.msra.mxu0 0.0
        %541 = vmatprep.subr.mxu0 0.0
        %542 = vmatpush2.msra.mxu0 0.0
        %543 = vmatprep.subr.mxu0 0.0
        %544 = vmatpush2.msra.mxu0 0.0
        %545 = vmatprep.subr.mxu0 0.0
        %546 = vmatpush2.msra.mxu0 0.0
        %547 = vmatprep.subr.mxu0 0.0
        %548 = vmatpush2.msra.mxu0 0.0
        %549 = vmatprep.subr.mxu0 0.0
        %550 = vmatpush2.msra.mxu0 0.0
        %551 = vmatprep.subr.mxu0 0.0
        %552 = vmatpush2.msra.mxu0 0.0
        %553 = vmatprep.subr.mxu0 0.0
        %554 = vmatpush2.msra.mxu0 0.0
        %555 = vmatprep.subr.mxu0 0.0
        %556 = vmatpush2.msra.mxu0 0.0
        %557 = vmatprep.subr.mxu0 0.0
        %558 = vmatpush2.msra.mxu0 0.0
        %559 = vmatprep.subr.mxu0 0.0
        %560 = vmatpush2.msra.mxu0 0.0
        %561 = vmatprep.subr.mxu0 0.0
        %562 = vmatpush2.msra.mxu0 0.0
        %563 = vmatprep.mubr.f32.mxu0 0.0
        %564 = vmatmul.mubr.f32.gmra.mxu0 %v497
        %v565 = vpop.f32.mrf.mxu0
        %v566 = vadd.f32 0.0, %v565
        %v567 = vpop.f32.mrf.mxu0
        %v568 = vadd.f32 0.0, %v567
        %569 = vdwg.mxu0
        %v571 = vsel %vm495, %v477, 0
        %573 = vmatprep.subr.mxu0 0.0
        %574 = vmatpush1.msra.mxu0 0.0
        %575 = vmatprep.subr.mxu0 0.0
        %576 = vmatpush1.msra.mxu0 0.0
        %577 = vmatprep.subr.mxu0 0.0
        %578 = vmatpush1.msra.mxu0 0.0
        %579 = vmatprep.subr.mxu0 0.0
        %580 = vmatpush1.msra.mxu0 0.0
        %581 = vmatprep.subr.mxu0 0.0
        %582 = vmatpush1.msra.mxu0 0.0
        %583 = vmatprep.subr.mxu0 0.0
        %584 = vmatpush1.msra.mxu0 0.0
        %585 = vmatprep.subr.mxu0 0.0
        %586 = vmatpush1.msra.mxu0 0.0
        %587 = vmatprep.subr.mxu0 0.0
        %588 = vmatpush1.msra.mxu0 0.0
        %589 = vmatprep.subr.mxu0 0.0
        %590 = vmatpush1.msra.mxu0 0.0
        %591 = vmatprep.subr.mxu0 0.0
        %592 = vmatpush1.msra.mxu0 0.0
        %593 = vmatprep.subr.mxu0 0.0
        %594 = vmatpush1.msra.mxu0 0.0
        %595 = vmatprep.subr.mxu0 0.0
        %596 = vmatpush1.msra.mxu0 0.0
        %597 = vmatprep.subr.mxu0 %v485
        %598 = vmatpush1.msra.mxu0 %v484
        %599 = vmatprep.subr.mxu0 %v483
        %600 = vmatpush1.msra.mxu0 %v482
        %601 = vmatprep.subr.mxu0 %v481
        %602 = vmatpush1.msra.mxu0 %v480
        %603 = vmatprep.subr.mxu0 %v479
        %604 = vmatpush1.msra.mxu0 %v478
        %605 = vmatprep.subr.mxu0 0.0
        %606 = vmatpush2.msra.mxu0 0.0
        %607 = vmatprep.subr.mxu0 0.0
        %608 = vmatpush2.msra.mxu0 0.0
        %609 = vmatprep.subr.mxu0 0.0
        %610 = vmatpush2.msra.mxu0 0.0
        %611 = vmatprep.subr.mxu0 0.0
        %612 = vmatpush2.msra.mxu0 0.0
        %613 = vmatprep.subr.mxu0 0.0
        %614 = vmatpush2.msra.mxu0 0.0
        %615 = vmatprep.subr.mxu0 0.0
        %616 = vmatpush2.msra.mxu0 0.0
        %617 = vmatprep.subr.mxu0 0.0
        %618 = vmatpush2.msra.mxu0 0.0
        %619 = vmatprep.subr.mxu0 0.0
        %620 = vmatpush2.msra.mxu0 0.0
        %621 = vmatprep.subr.mxu0 0.0
        %622 = vmatpush2.msra.mxu0 0.0
        %623 = vmatprep.subr.mxu0 0.0
        %624 = vmatpush2.msra.mxu0 0.0
        %625 = vmatprep.subr.mxu0 0.0
        %626 = vmatpush2.msra.mxu0 0.0
        %627 = vmatprep.subr.mxu0 0.0
        %628 = vmatpush2.msra.mxu0 0.0
        %629 = vmatprep.subr.mxu0 0.0
        %630 = vmatpush2.msra.mxu0 0.0
        %631 = vmatprep.subr.mxu0 0.0
        %632 = vmatpush2.msra.mxu0 0.0
        %633 = vmatprep.subr.mxu0 0.0
        %634 = vmatpush2.msra.mxu0 0.0
        %635 = vmatprep.subr.mxu0 0.0
        %636 = vmatpush2.msra.mxu0 0.0
        %637 = vmatprep.mubr.f32.mxu0 0.0
        %638 = vmatmul.mubr.f32.gmra.mxu0 %v571
        %v639 = vpop.f32.mrf.mxu0
        %v640 = vadd.f32 %v566, %v639
        %v641 = vpop.f32.mrf.mxu0
        %v642 = vadd.f32 %v568, %v641
        %643 = vdwg.mxu0
        %v644 = vld [vmem:[%s416] sm:$0xff]
        %v645 = vld [vmem:[#allocation11] sm:$0xff]
        %v646 = vld [vmem:[#allocation11 + $0x8] sm:$0xff]
        %v647 = vld [vmem:[#allocation11 + $0x10] sm:$0xff]
        %v648 = vld [vmem:[#allocation11 + $0x18] sm:$0xff]
        %v649 = vld [vmem:[#allocation11 + $0x20] sm:$0xff]
        %v650 = vld [vmem:[#allocation11 + $0x28] sm:$0xff]
        %v651 = vld [vmem:[#allocation11 + $0x30] sm:$0xff]
        %v652 = vld [vmem:[#allocation11 + $0x38] sm:$0xff]
        %v654 = vsel %vm495, %v644, 0
        %656 = vmatprep.subr.mxu0 0.0
        %657 = vmatpush1.msra.mxu0 0.0
        %658 = vmatprep.subr.mxu0 0.0
        %659 = vmatpush1.msra.mxu0 0.0
        %660 = vmatprep.subr.mxu0 0.0
        %661 = vmatpush1.msra.mxu0 0.0
        %662 = vmatprep.subr.mxu0 0.0
        %663 = vmatpush1.msra.mxu0 0.0
        %664 = vmatprep.subr.mxu0 0.0
        %665 = vmatpush1.msra.mxu0 0.0
        %666 = vmatprep.subr.mxu0 0.0
        %667 = vmatpush1.msra.mxu0 0.0
        %668 = vmatprep.subr.mxu0 0.0
        %669 = vmatpush1.msra.mxu0 0.0
        %670 = vmatprep.subr.mxu0 0.0
        %671 = vmatpush1.msra.mxu0 0.0
        %672 = vmatprep.subr.mxu0 0.0
        %673 = vmatpush1.msra.mxu0 0.0
        %674 = vmatprep.subr.mxu0 0.0
        %675 = vmatpush1.msra.mxu0 0.0
        %676 = vmatprep.subr.mxu0 0.0
        %677 = vmatpush1.msra.mxu0 0.0
        %678 = vmatprep.subr.mxu0 0.0
        %679 = vmatpush1.msra.mxu0 0.0
        %680 = vmatprep.subr.mxu0 %v652
        %681 = vmatpush1.msra.mxu0 %v651
        %682 = vmatprep.subr.mxu0 %v650
        %683 = vmatpush1.msra.mxu0 %v649
        %684 = vmatprep.subr.mxu0 %v648
        %685 = vmatpush1.msra.mxu0 %v647
        %686 = vmatprep.subr.mxu0 %v646
        %687 = vmatpush1.msra.mxu0 %v645
        %688 = vmatprep.subr.mxu0 0.0
        %689 = vmatpush2.msra.mxu0 0.0
        %690 = vmatprep.subr.mxu0 0.0
        %691 = vmatpush2.msra.mxu0 0.0
        %692 = vmatprep.subr.mxu0 0.0
        %693 = vmatpush2.msra.mxu0 0.0
        %694 = vmatprep.subr.mxu0 0.0
        %695 = vmatpush2.msra.mxu0 0.0
        %696 = vmatprep.subr.mxu0 0.0
        %697 = vmatpush2.msra.mxu0 0.0
        %698 = vmatprep.subr.mxu0 0.0
        %699 = vmatpush2.msra.mxu0 0.0
        %700 = vmatprep.subr.mxu0 0.0
        %701 = vmatpush2.msra.mxu0 0.0
        %702 = vmatprep.subr.mxu0 0.0
        %703 = vmatpush2.msra.mxu0 0.0
        %704 = vmatprep.subr.mxu0 0.0
        %705 = vmatpush2.msra.mxu0 0.0
        %706 = vmatprep.subr.mxu0 0.0
        %707 = vmatpush2.msra.mxu0 0.0
        %708 = vmatprep.subr.mxu0 0.0
        %709 = vmatpush2.msra.mxu0 0.0
        %710 = vmatprep.subr.mxu0 0.0
        %711 = vmatpush2.msra.mxu0 0.0
        %712 = vmatprep.subr.mxu0 0.0
        %713 = vmatpush2.msra.mxu0 0.0
        %714 = vmatprep.subr.mxu0 0.0
        %715 = vmatpush2.msra.mxu0 0.0
        %716 = vmatprep.subr.mxu0 0.0
        %717 = vmatpush2.msra.mxu0 0.0
        %718 = vmatprep.subr.mxu0 0.0
        %719 = vmatpush2.msra.mxu0 0.0
        %720 = vmatprep.mubr.f32.mxu0 0.0
        %721 = vmatmul.mubr.f32.gmra.mxu0 %v654
        %v722 = vpop.f32.mrf.mxu0
        %v723 = vadd.f32 0.0, %v722
        %v724 = vpop.f32.mrf.mxu0
        %v725 = vadd.f32 0.0, %v724
        %726 = vdwg.mxu0
        %v727 = vadd.f32 %v640, %v723
        %v728 = vadd.f32 %v642, %v725
        %v729 = vld [vmem:[%s6] sm:$0x3]
        %v731 = vlaneseq
        %v732 = vshrl.u32 %v731, 7
        %v733 = vsub.s32 0, %v732
        %v734 = vrot.slane %v729, %v733
        %v735 = vlaneseq
        %v736 = vshrl.u32 %v735, 7
        %v737 = vsub.s32 1, %v736
        %v738 = vrot.slane %v729, %v737
        %v741 = vadd.f32 %v727, %v734
        %v742 = vadd.f32 %v728, %v738
        %vm743 = vcmp.gt.f32.partialorder %v741, 0.0
        %vm744 = vcmp.gt.f32.partialorder %v742, 0.0
        %v745 = vmul.f32 %v741, 0.01
        %v746 = vmul.f32 %v742, 0.01
        %v747 = vsel %vm743, %v741, %v745
        %v748 = vsel %vm744, %v742, %v746
        %v749 = vld [vmem:[#allocation13] sm:$0xff]
        %v750 = vld [vmem:[#allocation13 + $0x8] sm:$0xff]
        %v751 = vld [vmem:[#allocation13 + $0x10] sm:$0xff]
        %v752 = vld [vmem:[#allocation13 + $0x18] sm:$0xff]
        %v753 = vld [vmem:[#allocation13 + $0x20] sm:$0xff]
        %v754 = vld [vmem:[#allocation13 + $0x28] sm:$0xff]
        %v755 = vld [vmem:[#allocation13 + $0x30] sm:$0xff]
        %v756 = vld [vmem:[#allocation13 + $0x38] sm:$0xff]
        %v757 = vld [vmem:[#allocation13 + $0x40] sm:$0xff]
        %v758 = vld [vmem:[#allocation13 + $0x48] sm:$0xff]
        %v759 = vld [vmem:[#allocation13 + $0x50] sm:$0xff]
        %v760 = vld [vmem:[#allocation13 + $0x58] sm:$0xff]
        %v761 = vld [vmem:[#allocation13 + $0x60] sm:$0xff]
        %v762 = vld [vmem:[#allocation13 + $0x68] sm:$0xff]
        %v763 = vld [vmem:[#allocation13 + $0x70] sm:$0xff]
        %v764 = vld [vmem:[#allocation13 + $0x78] sm:$0xff]
        %v765 = vld [vmem:[#allocation13 + $0x80] sm:$0xff]
        %v766 = vld [vmem:[#allocation13 + $0x88] sm:$0xff]
        %v767 = vld [vmem:[#allocation13 + $0x90] sm:$0xff]
        %v768 = vld [vmem:[#allocation13 + $0x98] sm:$0xff]
        %v769 = vld [vmem:[#allocation13 + $0xa0] sm:$0xff]
        %v770 = vld [vmem:[#allocation13 + $0xa8] sm:$0xff]
        %v771 = vld [vmem:[#allocation13 + $0xb0] sm:$0xff]
        %v772 = vld [vmem:[#allocation13 + $0xb8] sm:$0xff]
        %v773 = vld [vmem:[#allocation13 + $0xc0] sm:$0xff]
        %v774 = vld [vmem:[#allocation13 + $0xc8] sm:$0xff]
        %v775 = vld [vmem:[#allocation13 + $0xd0] sm:$0xff]
        %v776 = vld [vmem:[#allocation13 + $0xd8] sm:$0xff]
        %v777 = vld [vmem:[#allocation13 + $0xe0] sm:$0xff]
        %v778 = vld [vmem:[#allocation13 + $0xe8] sm:$0xff]
        %v779 = vld [vmem:[#allocation13 + $0xf0] sm:$0xff]
        %v780 = vld [vmem:[#allocation13 + $0xf8] sm:$0xff]
        %v781 = vld [vmem:[%s8] sm:$0x1]
        %v783 = vlaneseq
        %v784 = vshrl.u32 %v783, 7
        %v785 = vsub.s32 0, %v784
        %v786 = vrot.slane %v781, %v785
        %788 = vmatprep.subr.mxu0 0.0
        %789 = vmatpush1.msra.mxu0 %v764
        %790 = vmatprep.subr.mxu0 0.0
        %791 = vmatpush1.msra.mxu0 %v763
        %792 = vmatprep.subr.mxu0 0.0
        %793 = vmatpush1.msra.mxu0 %v762
        %794 = vmatprep.subr.mxu0 0.0
        %795 = vmatpush1.msra.mxu0 %v761
        %796 = vmatprep.subr.mxu0 0.0
        %797 = vmatpush1.msra.mxu0 %v760
        %798 = vmatprep.subr.mxu0 0.0
        %799 = vmatpush1.msra.mxu0 %v759
        %800 = vmatprep.subr.mxu0 0.0
        %801 = vmatpush1.msra.mxu0 %v758
        %802 = vmatprep.subr.mxu0 0.0
        %803 = vmatpush1.msra.mxu0 %v757
        %804 = vmatprep.subr.mxu0 0.0
        %805 = vmatpush1.msra.mxu0 %v756
        %806 = vmatprep.subr.mxu0 0.0
        %807 = vmatpush1.msra.mxu0 %v755
        %808 = vmatprep.subr.mxu0 0.0
        %809 = vmatpush1.msra.mxu0 %v754
        %810 = vmatprep.subr.mxu0 0.0
        %811 = vmatpush1.msra.mxu0 %v753
        %812 = vmatprep.subr.mxu0 0.0
        %813 = vmatpush1.msra.mxu0 %v752
        %814 = vmatprep.subr.mxu0 0.0
        %815 = vmatpush1.msra.mxu0 %v751
        %816 = vmatprep.subr.mxu0 0.0
        %817 = vmatpush1.msra.mxu0 %v750
        %818 = vmatprep.subr.mxu0 0.0
        %819 = vmatpush1.msra.mxu0 %v749
        %820 = vmatprep.subr.mxu0 0.0
        %821 = vmatpush2.msra.mxu0 %v780
        %822 = vmatprep.subr.mxu0 0.0
        %823 = vmatpush2.msra.mxu0 %v779
        %824 = vmatprep.subr.mxu0 0.0
        %825 = vmatpush2.msra.mxu0 %v778
        %826 = vmatprep.subr.mxu0 0.0
        %827 = vmatpush2.msra.mxu0 %v777
        %828 = vmatprep.subr.mxu0 0.0
        %829 = vmatpush2.msra.mxu0 %v776
        %830 = vmatprep.subr.mxu0 0.0
        %831 = vmatpush2.msra.mxu0 %v775
        %832 = vmatprep.subr.mxu0 0.0
        %833 = vmatpush2.msra.mxu0 %v774
        %834 = vmatprep.subr.mxu0 0.0
        %835 = vmatpush2.msra.mxu0 %v773
        %836 = vmatprep.subr.mxu0 0.0
        %837 = vmatpush2.msra.mxu0 %v772
        %838 = vmatprep.subr.mxu0 0.0
        %839 = vmatpush2.msra.mxu0 %v771
        %840 = vmatprep.subr.mxu0 0.0
        %841 = vmatpush2.msra.mxu0 %v770
        %842 = vmatprep.subr.mxu0 0.0
        %843 = vmatpush2.msra.mxu0 %v769
        %844 = vmatprep.subr.mxu0 0.0
        %845 = vmatpush2.msra.mxu0 %v768
        %846 = vmatprep.subr.mxu0 0.0
        %847 = vmatpush2.msra.mxu0 %v767
        %848 = vmatprep.subr.mxu0 0.0
        %849 = vmatpush2.msra.mxu0 %v766
        %850 = vmatprep.subr.mxu0 0.0
        %851 = vmatpush2.msra.mxu0 %v765
        %852 = vmatprep.mubr.f32.mxu0 %v748
        %853 = vmatmul.mubr.f32.gmra.mxu0 %v747
        %v854 = vpop.f32.mrf.mxu0
        %v855 = vadd.f32 %v786, %v854
        %v856 = vpop.f32.mrf.mxu0
        %857 = vdwg.mxu0
        %v858 = vtanh.pop %v855
        %859 = vst [vmem:[%s476] sm:$0xff] %v858
        %s860 = sand.u32 %s243, 1
        %s861 = scalar_lea.sflag [#allocation4], %s860
        %s862 = sand.u32 %s243, 1
        %s863 = smul.addr %s862, 8
        %s864 = scalar_lea.vmem [#allocation14], %s863
        // Predicated region
        $region85: #{tpu_custom_call.1} parent=55 // pred_check
          %p865 = pneg %p253
        $region86: #{tpu_custom_call.1} parent=55 // pred_check_branch
          %867 = sbr.rel (%p865) target = $region88
        $region87: #{tpu_custom_call.1} parent=55 // pred_region
          %s869 = ssub.s32 128, 128
          %870 = vsyncadd %s861, %s869
          %s871 = smul.addr %s31, 128
          %s872 = scalar_lea.hbm %s9, %s871
          %s874 = sshll.u32 %s864, 4
          %s875 = int_to_ptr.vmem [resolvable:$true] %s874
          %877 = dma.vmem_to_hbm [thread:$0]  %s875, 128, %s872, %s861
        $region88: #{tpu_custom_call.1} parent=55 // pred_fallthru
          _
      $region56: #{tpu_custom_call.1} parent=5 // pred_fallthru
        _
      %p878 = scmp.le.s32.totalorder 2, %s26
      // Predicated region
      $region89: #{tpu_custom_call.1} parent=5 // pred_check
        %p879 = pneg %p878
      $region90: #{tpu_custom_call.1} parent=5 // pred_check_branch
        %881 = sbr.rel (%p879) target = $region92
      $region91: #{tpu_custom_call.1} parent=5 // pred_region
        %s882 = ssub.s32 %s26, 2
        // Predicated region
        $region93: #{tpu_custom_call.1} parent=91 // pred_check
          %p883 = pneg %p259
        $region94: #{tpu_custom_call.1} parent=91 // pred_check_branch
          %885 = sbr.rel (%p883) target = $region96
        $region95: #{tpu_custom_call.1} parent=91 // pred_region
          %s886 = sand.u32 %s244, 1
          %s887 = scalar_lea.sflag [#allocation4], %s886
          %s888 = sand.u32 %s244, 1
          %s889 = smul.addr %s888, 8
          %s890 = scalar_lea.vmem [#allocation14], %s889
          %891 = dma.done %s887, 128
        $region96: #{tpu_custom_call.1} parent=91 // pred_fallthru
          _
      $region92: #{tpu_custom_call.1} parent=5 // pred_fallthru
        _
    $region6: #{tpu_custom_call.1} parent=1 // loop_footer
      %s30 = sadd.s32 1, %s26
    $region7: #{tpu_custom_call.1} parent=1 // loop_footer_branch
      %25 = sbr.rel target = $region3
    $region8: #{tpu_custom_call.1} parent=1 // loop_exit
      _
    %892 = vsyncpa [#allocation3], 1
    %s893 = scalar_lea.sflag [#allocation3], 1
    %894 = vsyncpa %s893, 1
    %895 = vsyncpa [#allocation6], 1
    %s896 = scalar_lea.sflag [#allocation6], 1
    %897 = vsyncpa %s896, 1
    %898 = vsyncpa [#allocation9], 1
    %899 = vsyncpa [#allocation12], 1
    %900 = vsyncpa [#allocation4], 1
    %s901 = scalar_lea.sflag [#allocation4], 1
    %902 = vsyncpa %s901, 1

</llo_original>
